<compile_context>
chip_gen: v7x
topology: tpu7x:2x2x1
jax: 0.10.0
libtpu: 0.0.40
codegen_flags: <defaults>
</compile_context>

<pallas_src>
import jax
import jax.numpy as jnp
import numpy as np
from jax.experimental import pallas as pl
from jax.experimental.pallas import tpu as pltpu


def _round_up(x, m):
    return ((x + m - 1) // m) * m


def critic_kernel(x_ref, w1_ref, b1_ref, w2s_ref, w2a_ref, b2_ref, w3_ref,
                  b3_ref, out_ref):
    # x_ref: (S+A, tb) transposed [state; action] tile, batch on lanes.
    xt = x_ref[...]

    # fcs1: xs^T = relu(W1pad @ x^T + b1)   -> (h1, tb)
    xs = jnp.dot(w1_ref[...], xt, preferred_element_type=jnp.float32)
    xs = jnp.maximum(xs + b1_ref[...], 0.0)

    # fcs2 on concat(xs, action): two dots summed in f32 (no concat scratch).
    # h^T = relu(W2s @ xs^T + W2a_pad @ x^T + b2)   -> (h2, tb)
    h = (jnp.dot(w2s_ref[...], xs, preferred_element_type=jnp.float32)
         + jnp.dot(w2a_ref[...], xt, preferred_element_type=jnp.float32))
    h = jnp.maximum(h + b2_ref[...], 0.0)

    # fcs3: q^T = w3 @ h^T + b3  -> (1, tb), stored lane-dense directly.
    q = jnp.dot(w3_ref[...], h, preferred_element_type=jnp.float32)
    out_ref[...] = q + b3_ref[...]


def critic_forward(state, action, kernel_params, *, block_batch=2048):
    """state: (B, S) f32, action: (B, A) f32 -> (B, 1) f32."""
    w1p, b1c, w2s, w2ap, b2c, w3r, b3 = kernel_params
    B, S = state.shape
    A = action.shape[1]
    h1, sa = w1p.shape
    h2 = w2s.shape[0]
    assert sa == S + A

    # Fused, transposed input: rows 0..S-1 = state^T, rows S.. = action^T.
    xt = jnp.concatenate([state, action], axis=1).T            # (S+A, B)

    # Batch (lane) tile: one grid step for small B; multiple of 128 otherwise.
    tb = min(block_batch, _round_up(B, 128))
    bp = _round_up(B, tb)
    if bp != B:
        xt = jnp.pad(xt, ((0, 0), (0, bp - B)))

    out = pl.pallas_call(
        critic_kernel,
        out_shape=jax.ShapeDtypeStruct((1, bp), jnp.float32),
        grid_spec=pltpu.PrefetchScalarGridSpec(
            num_scalar_prefetch=0,
            grid=(bp // tb,),
            in_specs=[
                pl.BlockSpec((sa, tb), lambda i: (0, i)),    # x^T batch tile
                pl.BlockSpec((h1, sa), lambda i: (0, 0)),    # W1 (zero-padded cols)
                pl.BlockSpec((h1, 1), lambda i: (0, 0)),     # b1 column
                pl.BlockSpec((h2, h1), lambda i: (0, 0)),    # W2 state-hidden block
                pl.BlockSpec((h2, sa), lambda i: (0, 0)),    # W2 action block (padded)
                pl.BlockSpec((h2, 1), lambda i: (0, 0)),     # b2 column
                pl.BlockSpec((1, h2), lambda i: (0, 0)),     # w3 row
                pl.BlockSpec((1, 1), lambda i: (0, 0)),      # b3
            ],
            out_specs=pl.BlockSpec((1, tb), lambda i: (0, i)),
        ),
        compiler_params=pltpu.CompilerParams(
            dimension_semantics=("parallel",),
        ),
    )(xt, w1p, b1c, w2s, w2ap, b2c, w3r, b3)
    return out[0, :B].reshape(B, 1)


def init_critic_params(key, state_size, action_size, hidden_layers):
    """Raw (PyTorch-layout) params mirroring reset_parameters()."""
    h1, h2 = hidden_layers
    k1, k2, k3, kb1, kb2, kb3 = jax.random.split(key, 6)

    lim1 = 1.0 / np.sqrt(state_size)
    w1 = jax.random.uniform(k1, (h1, state_size), jnp.float32, -lim1, lim1)
    b1 = jax.random.uniform(kb1, (h1,), jnp.float32, -lim1, lim1)

    lim2 = 1.0 / np.sqrt(h1 + action_size)
    w2 = jax.random.uniform(k2, (h2, h1 + action_size), jnp.float32, -lim2, lim2)
    b2 = jax.random.uniform(kb2, (h2,), jnp.float32, -lim2, lim2)

    w3 = jax.random.uniform(k3, (1, h2), jnp.float32, -0.003, 0.003)
    b3 = jax.random.uniform(kb3, (1,), jnp.float32, -0.003, 0.003)
    return (w1, b1, w2, b2, w3, b3)


def pack_params(raw, state_size, action_size):
    """Pack raw params into the transposed-dataflow layout the kernel expects."""
    w1, b1, w2, b2, w3, b3 = raw
    h1 = w1.shape[0]
    h2 = w2.shape[0]
    sa = state_size + action_size

    # Layer 1 weight padded with zero columns for the action rows of x^T.
    w1p = jnp.zeros((h1, sa), jnp.float32).at[:, :state_size].set(w1)
    # Layer 2 split: state-hidden block (exact) + action block padded with
    # zero columns for the state rows of x^T.
    w2s = w2[:, :h1]                                          # (h2, h1)
    w2ap = jnp.zeros((h2, sa), jnp.float32).at[:, state_size:].set(w2[:, h1:])
    return (w1p, b1.reshape(h1, 1), w2s, w2ap, b2.reshape(h2, 1),
            w3.reshape(1, h2), b3.reshape(1, 1))


def critic_reference(state, action, raw):
    """Pure-JAX reference that mirrors the PyTorch forward exactly."""
    w1, b1, w2, b2, w3, b3 = raw
    xs = jnp.maximum(state @ w1.T + b1, 0.0)
    x = jnp.concatenate([xs, action], axis=1)
    h = jnp.maximum(x @ w2.T + b2, 0.0)
    return h @ w3.T + b3


if __name__ == "__main__":
    STATE_SIZE = 32
    ACTION_SIZE = 8
    HIDDEN = [64, 32]
    BATCH = 256  # single grid step with the larger batch tile

    key = jax.random.PRNGKey(0)
    kp, ks, ka = jax.random.split(key, 3)

    raw_params = init_critic_params(kp, STATE_SIZE, ACTION_SIZE, HIDDEN)
    kernel_params = pack_params(raw_params, STATE_SIZE, ACTION_SIZE)

    state = jax.random.normal(ks, (BATCH, STATE_SIZE), jnp.float32)
    action = jax.random.normal(ka, (BATCH, ACTION_SIZE), jnp.float32)

    q = critic_forward(state, action, kernel_params)
    q = jax.block_until_ready(q)

    q_ref = critic_reference(state, action, raw_params)
    np.testing.assert_allclose(np.asarray(q), np.asarray(q_ref),
                               rtol=1e-5, atol=1e-5)
    assert q.shape == (BATCH, 1)
    print("KERNEL_OK")
</pallas_src>

<mosaic_0001>
module attributes {stable_mosaic.version = 11 : i64} {
  func.func @critic_kernel(%arg0: i32, %arg1: memref<40x256xf32, #tpu.memory_space<vmem>>, %arg2: memref<64x40xf32, #tpu.memory_space<vmem>>, %arg3: memref<64x1xf32, #tpu.memory_space<vmem>>, %arg4: memref<32x64xf32, #tpu.memory_space<vmem>>, %arg5: memref<32x40xf32, #tpu.memory_space<vmem>>, %arg6: memref<32x1xf32, #tpu.memory_space<vmem>>, %arg7: memref<1x32xf32, #tpu.memory_space<vmem>>, %arg8: memref<1x1xf32, #tpu.memory_space<vmem>>, %arg9: memref<1x256xf32, #tpu.memory_space<vmem>>) attributes {dimension_semantics = [#tpu.dimension_semantics<parallel>], iteration_bounds = array<i64: 1>, scalar_prefetch = 0 : i64, scratch_operands = 0 : i64, tpu.core_type = #tpu.core_type<tc>, window_params = [{transform_indices = @transform_0, window_bounds = array<i64: 40, 256>}, {pipeline_mode = #tpu.pipeline_mode<synchronous>, transform_indices = @transform_1, window_bounds = array<i64: 64, 40>}, {pipeline_mode = #tpu.pipeline_mode<synchronous>, transform_indices = @transform_2, window_bounds = array<i64: 64, 1>}, {pipeline_mode = #tpu.pipeline_mode<synchronous>, transform_indices = @transform_3, window_bounds = array<i64: 32, 64>}, {pipeline_mode = #tpu.pipeline_mode<synchronous>, transform_indices = @transform_4, window_bounds = array<i64: 32, 40>}, {pipeline_mode = #tpu.pipeline_mode<synchronous>, transform_indices = @transform_5, window_bounds = array<i64: 32, 1>}, {pipeline_mode = #tpu.pipeline_mode<synchronous>, transform_indices = @transform_6, window_bounds = array<i64: 1, 32>}, {pipeline_mode = #tpu.pipeline_mode<synchronous>, transform_indices = @transform_7, window_bounds = array<i64: 1, 1>}, {transform_indices = @transform_8, window_bounds = array<i64: 1, 256>}]} {
    %c0 = arith.constant 0 : index
    %c0_0 = arith.constant 0 : index
    %0 = vector.load %arg1[%c0, %c0_0] : memref<40x256xf32, #tpu.memory_space<vmem>>, vector<40x256xf32>
    %c0_1 = arith.constant 0 : index
    %c0_2 = arith.constant 0 : index
    %1 = vector.load %arg2[%c0_1, %c0_2] : memref<64x40xf32, #tpu.memory_space<vmem>>, vector<64x40xf32>
    %cst = arith.constant dense<0.000000e+00> : vector<64x256xf32>
    %2 = tpu.matmul %1, %0, %cst {dimension_numbers = #tpu.dot_dimension_numbers<[1], [0], [0], [1], [0, 0, 1, 1], [], []>} : vector<64x40xf32>, vector<40x256xf32>, vector<64x256xf32> -> vector<64x256xf32>
    %c0_3 = arith.constant 0 : index
    %c0_4 = arith.constant 0 : index
    %3 = vector.load %arg3[%c0_3, %c0_4] : memref<64x1xf32, #tpu.memory_space<vmem>>, vector<64x1xf32>
    %4 = vector.broadcast %3 : vector<64x1xf32> to vector<64x256xf32>
    %5 = arith.addf %2, %4 : vector<64x256xf32>
    %cst_5 = arith.constant 0.000000e+00 : f32
    %6 = vector.broadcast %cst_5 : f32 to vector<64x256xf32>
    %7 = arith.maximumf %5, %6 : vector<64x256xf32>
    %c0_6 = arith.constant 0 : index
    %c0_7 = arith.constant 0 : index
    %8 = vector.load %arg4[%c0_6, %c0_7] : memref<32x64xf32, #tpu.memory_space<vmem>>, vector<32x64xf32>
    %cst_8 = arith.constant dense<0.000000e+00> : vector<32x256xf32>
    %9 = tpu.matmul %8, %7, %cst_8 {dimension_numbers = #tpu.dot_dimension_numbers<[1], [0], [0], [1], [0, 0, 1, 1], [], []>} : vector<32x64xf32>, vector<64x256xf32>, vector<32x256xf32> -> vector<32x256xf32>
    %c0_9 = arith.constant 0 : index
    %c0_10 = arith.constant 0 : index
    %10 = vector.load %arg5[%c0_9, %c0_10] : memref<32x40xf32, #tpu.memory_space<vmem>>, vector<32x40xf32>
    %cst_11 = arith.constant dense<0.000000e+00> : vector<32x256xf32>
    %11 = tpu.matmul %10, %0, %cst_11 {dimension_numbers = #tpu.dot_dimension_numbers<[1], [0], [0], [1], [0, 0, 1, 1], [], []>} : vector<32x40xf32>, vector<40x256xf32>, vector<32x256xf32> -> vector<32x256xf32>
    %12 = arith.addf %9, %11 : vector<32x256xf32>
    %c0_12 = arith.constant 0 : index
    %c0_13 = arith.constant 0 : index
    %13 = vector.load %arg6[%c0_12, %c0_13] : memref<32x1xf32, #tpu.memory_space<vmem>>, vector<32x1xf32>
    %14 = vector.broadcast %13 : vector<32x1xf32> to vector<32x256xf32>
    %15 = arith.addf %12, %14 : vector<32x256xf32>
    %cst_14 = arith.constant 0.000000e+00 : f32
    %16 = vector.broadcast %cst_14 : f32 to vector<32x256xf32>
    %17 = arith.maximumf %15, %16 : vector<32x256xf32>
    %c0_15 = arith.constant 0 : index
    %c0_16 = arith.constant 0 : index
    %18 = vector.load %arg7[%c0_15, %c0_16] : memref<1x32xf32, #tpu.memory_space<vmem>>, vector<1x32xf32>
    %cst_17 = arith.constant dense<0.000000e+00> : vector<1x256xf32>
    %19 = tpu.matmul %18, %17, %cst_17 {dimension_numbers = #tpu.dot_dimension_numbers<[1], [0], [0], [1], [0, 0, 1, 1], [], []>} : vector<1x32xf32>, vector<32x256xf32>, vector<1x256xf32> -> vector<1x256xf32>
    %c0_18 = arith.constant 0 : index
    %c0_19 = arith.constant 0 : index
    %20 = vector.load %arg8[%c0_18, %c0_19] : memref<1x1xf32, #tpu.memory_space<vmem>>, vector<1x1xf32>
    %21 = vector.broadcast %20 : vector<1x1xf32> to vector<1x256xf32>
    %22 = arith.addf %19, %21 : vector<1x256xf32>
    %c0_20 = arith.constant 0 : index
    %c0_21 = arith.constant 0 : index
    %23 = vector.load %arg9[%c0_20, %c0_21] : memref<1x256xf32, #tpu.memory_space<vmem>>, vector<1x256xf32>
    tpu.vector_store %arg9[%c0_20, %c0_21], %22 {strides = array<i32>} : memref<1x256xf32, #tpu.memory_space<vmem>>, vector<1x256xf32>,
    return
  }
  func.func @transform_0(%arg0: i32) -> (i32, i32) {
    %c0_i32 = arith.constant 0 : i32
    %c0_i32_0 = arith.constant 0 : i32
    return %c0_i32, %arg0 : i32, i32
  }
  func.func @transform_1(%arg0: i32) -> (i32, i32) {
    %c0_i32 = arith.constant 0 : i32
    %c0_i32_0 = arith.constant 0 : i32
    %c0_i32_1 = arith.constant 0 : i32
    return %c0_i32, %c0_i32_0 : i32, i32
  }
  func.func @transform_2(%arg0: i32) -> (i32, i32) {
    %c0_i32 = arith.constant 0 : i32
    %c0_i32_0 = arith.constant 0 : i32
    %c0_i32_1 = arith.constant 0 : i32
    return %c0_i32, %c0_i32_0 : i32, i32
  }
  func.func @transform_3(%arg0: i32) -> (i32, i32) {
    %c0_i32 = arith.constant 0 : i32
    %c0_i32_0 = arith.constant 0 : i32
    %c0_i32_1 = arith.constant 0 : i32
    return %c0_i32, %c0_i32_0 : i32, i32
  }
  func.func @transform_4(%arg0: i32) -> (i32, i32) {
    %c0_i32 = arith.constant 0 : i32
    %c0_i32_0 = arith.constant 0 : i32
    %c0_i32_1 = arith.constant 0 : i32
    return %c0_i32, %c0_i32_0 : i32, i32
  }
  func.func @transform_5(%arg0: i32) -> (i32, i32) {
    %c0_i32 = arith.constant 0 : i32
    %c0_i32_0 = arith.constant 0 : i32
    %c0_i32_1 = arith.constant 0 : i32
    return %c0_i32, %c0_i32_0 : i32, i32
  }
  func.func @transform_6(%arg0: i32) -> (i32, i32) {
    %c0_i32 = arith.constant 0 : i32
    %c0_i32_0 = arith.constant 0 : i32
    %c0_i32_1 = arith.constant 0 : i32
    return %c0_i32, %c0_i32_0 : i32, i32
  }
  func.func @transform_7(%arg0: i32) -> (i32, i32) {
    %c0_i32 = arith.constant 0 : i32
    %c0_i32_0 = arith.constant 0 : i32
    %c0_i32_1 = arith.constant 0 : i32
    return %c0_i32, %c0_i32_0 : i32, i32
  }
  func.func @transform_8(%arg0: i32) -> (i32, i32) {
    %c0_i32 = arith.constant 0 : i32
    %c0_i32_0 = arith.constant 0 : i32
    return %c0_i32, %arg0 : i32, i32
  }
}

</mosaic_0001>

<llo_original>
// kernel: tpu_custom_call.1
$region0: #{tpu_custom_call.1}
  #allocation0 [shape = 'u32[]', space=smem, size = 0x4, offset = 0x4, fixed_abs, tag = 'smem constant byte address 0x4 - core index']
  #allocation1 [shape = 'u32[144,128]{1,0:T(1,128)}', space=vmem, size = 0x12000, scoped, tag = 'internal scratch']
  #allocation2 [shape = 'f32[1,1]{1,0:T(1,128)S(1)}', space=vmem, size = 0x200, scoped, tag = 'scoped memory for tpu_custom_call.1']
  %s0 = inlined_call_operand.vmem [shape: f32[40,256], index: 0, kind: input, shape index: {}]
  %s1 = inlined_call_operand.vmem [shape: f32[64,40], index: 1, kind: input, shape index: {}]
  %s2 = inlined_call_operand.vmem [shape: f32[64,1], index: 2, kind: input, shape index: {}]
  %s3 = inlined_call_operand.vmem [shape: f32[32,64], index: 3, kind: input, shape index: {}]
  %s4 = inlined_call_operand.vmem [shape: f32[32,40], index: 4, kind: input, shape index: {}]
  %s5 = inlined_call_operand.vmem [shape: f32[32,1], index: 5, kind: input, shape index: {}]
  %s6 = inlined_call_operand.vmem [shape: f32[1,32], index: 6, kind: input, shape index: {}]
  %s7 = inlined_call_operand.<no memory space> [shape: f32[1,1], index: 7, kind: input, shape index: {}]
  %s8 = inlined_call_operand.hbm [shape: f32[1,256], index: 8, kind: output, shape index: {}]
  %s9 = sld [smem:[#allocation0]]
  $region42: #{tpu_custom_call.1} parent=0
    _
  %s11 = ssub.s32 1, %s9
  %s12 = scalar_select 0, %s11, %s9
  %v13 = vstv %s7
  %14 = vst [vmem:[#allocation2] sm:$0x1] %v13
  $region1: #{tpu_custom_call.1} parent=0
    #allocation3 [shape = 'u8[1024]{0}', space=vmem, size = 0x400, scoped, tag = 'output window, operand 0, single buffered']
    #allocation4 [shape = 's32[1]{0}', space=sflag, size = 0x4, scoped, tag = 'scoped memory for tpu_custom_call.1']
    %15 = vsyncpa [#allocation4], 0
    // Predicated region
    $region2: #{tpu_custom_call.1} parent=1 // pred_check
      _
    $region3: #{tpu_custom_call.1} parent=1 // pred_check_branch
      %17 = sbr.rel (0) target = $region5
    $region4: #{tpu_custom_call.1} parent=1 // pred_region
      _
    $region5: #{tpu_custom_call.1} parent=1 // pred_fallthru
      _
    // Predicated region
    $region6: #{tpu_custom_call.1} parent=1 // pred_check
      _
    $region7: #{tpu_custom_call.1} parent=1 // pred_check_branch
      %19 = sbr.rel (0) target = $region9
    $region8: #{tpu_custom_call.1} parent=1 // pred_region
      _
    $region9: #{tpu_custom_call.1} parent=1 // pred_fallthru
      _
    // Predicated region
    $region10: #{tpu_custom_call.1} parent=1 // pred_check
      _
    $region11: #{tpu_custom_call.1} parent=1 // pred_check_branch
      %21 = sbr.rel (0) target = $region13
    $region12: #{tpu_custom_call.1} parent=1 // pred_region
      _
    $region13: #{tpu_custom_call.1} parent=1 // pred_fallthru
      _
    // Predicated region
    $region14: #{tpu_custom_call.1} parent=1 // pred_check
      _
    $region15: #{tpu_custom_call.1} parent=1 // pred_check_branch
      %23 = sbr.rel (0) target = $region17
    $region16: #{tpu_custom_call.1} parent=1 // pred_region
      _
    $region17: #{tpu_custom_call.1} parent=1 // pred_fallthru
      _
    // Predicated region
    $region18: #{tpu_custom_call.1} parent=1 // pred_check
      _
    $region19: #{tpu_custom_call.1} parent=1 // pred_check_branch
      %25 = sbr.rel (0) target = $region21
    $region20: #{tpu_custom_call.1} parent=1 // pred_region
      _
    $region21: #{tpu_custom_call.1} parent=1 // pred_fallthru
      _
    // Predicated region
    $region22: #{tpu_custom_call.1} parent=1 // pred_check
      _
    $region23: #{tpu_custom_call.1} parent=1 // pred_check_branch
      %27 = sbr.rel (0) target = $region25
    $region24: #{tpu_custom_call.1} parent=1 // pred_region
      _
    $region25: #{tpu_custom_call.1} parent=1 // pred_fallthru
      _
    // Predicated region
    $region26: #{tpu_custom_call.1} parent=1 // pred_check
      _
    $region27: #{tpu_custom_call.1} parent=1 // pred_check_branch
      %29 = sbr.rel (0) target = $region29
    $region28: #{tpu_custom_call.1} parent=1 // pred_region
      _
    $region29: #{tpu_custom_call.1} parent=1 // pred_fallthru
      _
    // Predicated region
    $region30: #{tpu_custom_call.1} parent=1 // pred_check
      _
    $region31: #{tpu_custom_call.1} parent=1 // pred_check_branch
      %31 = sbr.rel (0) target = $region33
    $region32: #{tpu_custom_call.1} parent=1 // pred_region
      _
    $region33: #{tpu_custom_call.1} parent=1 // pred_fallthru
      _
    %v32 = vld [vmem:[%s0] sm:$0xff]
    %v33 = vld [vmem:[%s0 + $0x8] sm:$0xff]
    %v34 = vld [vmem:[%s0 + $0x10] sm:$0xff]
    %v35 = vld [vmem:[%s0 + $0x18] sm:$0xff]
    %v36 = vld [vmem:[%s0 + $0x20] sm:$0xff]
    %v37 = vld [vmem:[%s0 + $0x28] sm:$0xff]
    %v38 = vld [vmem:[%s0 + $0x30] sm:$0xff]
    %v39 = vld [vmem:[%s0 + $0x38] sm:$0xff]
    %v40 = vld [vmem:[%s0 + $0x40] sm:$0xff]
    %v41 = vld [vmem:[%s0 + $0x48] sm:$0xff]
    %v42 = vld [vmem:[%s1] sm:$0xff]
    %v43 = vld [vmem:[%s1 + $0x8] sm:$0xff]
    %v44 = vld [vmem:[%s1 + $0x10] sm:$0xff]
    %v45 = vld [vmem:[%s1 + $0x18] sm:$0xff]
    %v46 = vld [vmem:[%s1 + $0x20] sm:$0xff]
    %v47 = vld [vmem:[%s1 + $0x28] sm:$0xff]
    %v48 = vld [vmem:[%s1 + $0x30] sm:$0xff]
    %v49 = vld [vmem:[%s1 + $0x38] sm:$0xff]
    %v50 = vld [vmem:[%s2] sm:$0xff]
    %v51 = vld [vmem:[%s2 + $0x8] sm:$0xff]
    %v52 = vld [vmem:[%s2 + $0x10] sm:$0xff]
    %v53 = vld [vmem:[%s2 + $0x18] sm:$0xff]
    %v54 = vld [vmem:[%s2 + $0x20] sm:$0xff]
    %v55 = vld [vmem:[%s2 + $0x28] sm:$0xff]
    %v56 = vld [vmem:[%s2 + $0x30] sm:$0xff]
    %v57 = vld [vmem:[%s2 + $0x38] sm:$0xff]
    %59 = vset.pattern.permute.xlu0 0
    %60 = vperm.xlu0 %59, %v50
    %v61 = vpop.permute.xlu0 %60
    %64 = vset.pattern.permute.xlu0 0
    %65 = vperm.xlu0 %64, %v51
    %v66 = vpop.permute.xlu0 %65
    %69 = vset.pattern.permute.xlu0 0
    %70 = vperm.xlu0 %69, %v52
    %v71 = vpop.permute.xlu0 %70
    %74 = vset.pattern.permute.xlu0 0
    %75 = vperm.xlu0 %74, %v53
    %v76 = vpop.permute.xlu0 %75
    %79 = vset.pattern.permute.xlu0 0
    %80 = vperm.xlu0 %79, %v54
    %v81 = vpop.permute.xlu0 %80
    %84 = vset.pattern.permute.xlu0 0
    %85 = vperm.xlu0 %84, %v55
    %v86 = vpop.permute.xlu0 %85
    %89 = vset.pattern.permute.xlu0 0
    %90 = vperm.xlu0 %89, %v56
    %v91 = vpop.permute.xlu0 %90
    %94 = vset.pattern.permute.xlu0 0
    %95 = vperm.xlu0 %94, %v57
    %v96 = vpop.permute.xlu0 %95
    %vm98 = vcmask 326656
    %v100 = vsel %vm98, %v42, 0
    %v103 = vsel %vm98, %v43, 0
    %v106 = vsel %vm98, %v44, 0
    %v109 = vsel %vm98, %v45, 0
    %v112 = vsel %vm98, %v46, 0
    %v115 = vsel %vm98, %v47, 0
    %v118 = vsel %vm98, %v48, 0
    %v121 = vsel %vm98, %v49, 0
    %123 = vmatprep.subr.mxu0 %v33
    %124 = vmatpush1.msra.mxu0 %v32
    %125 = vmatprep.subr.mxu0 %v35
    %126 = vmatpush1.msra.mxu0 %v34
    %127 = vmatprep.subr.mxu0 %v37
    %128 = vmatpush1.msra.mxu0 %v36
    %129 = vmatprep.subr.mxu0 %v39
    %130 = vmatpush1.msra.mxu0 %v38
    %131 = vmatprep.subr.mxu0 %v41
    %132 = vmatpush1.msra.mxu0 %v40
    %133 = vmatprep.subr.mxu0 0.0
    %134 = vmatpush1.msra.mxu0 0.0
    %135 = vmatprep.subr.mxu0 0.0
    %136 = vmatpush1.msra.mxu0 0.0
    %137 = vmatprep.subr.mxu0 0.0
    %138 = vmatpush1.msra.mxu0 0.0
    %139 = vmatprep.subr.mxu0 0.0
    %140 = vmatpush1.msra.mxu0 0.0
    %141 = vmatprep.subr.mxu0 0.0
    %142 = vmatpush1.msra.mxu0 0.0
    %143 = vmatprep.subr.mxu0 0.0
    %144 = vmatpush1.msra.mxu0 0.0
    %145 = vmatprep.subr.mxu0 0.0
    %146 = vmatpush1.msra.mxu0 0.0
    %147 = vmatprep.subr.mxu0 0.0
    %148 = vmatpush1.msra.mxu0 0.0
    %149 = vmatprep.subr.mxu0 0.0
    %150 = vmatpush1.msra.mxu0 0.0
    %151 = vmatprep.subr.mxu0 0.0
    %152 = vmatpush1.msra.mxu0 0.0
    %153 = vmatprep.subr.mxu0 0.0
    %154 = vmatpush1.msra.mxu0 0.0
    %155 = vmatprep.subr.mxu0 0.0
    %156 = vmatpush1.msra.mxu0 0.0
    %157 = vmatprep.subr.mxu0 0.0
    %158 = vmatpush1.msra.mxu0 0.0
    %159 = vmatprep.subr.mxu0 0.0
    %160 = vmatpush1.msra.mxu0 0.0
    %161 = vmatprep.subr.mxu0 0.0
    %162 = vmatpush1.msra.mxu0 0.0
    %163 = vmatprep.subr.mxu0 0.0
    %164 = vmatpush1.msra.mxu0 0.0
    %165 = vmatprep.subr.mxu0 0.0
    %166 = vmatpush1.msra.mxu0 0.0
    %167 = vmatprep.subr.mxu0 0.0
    %168 = vmatpush1.msra.mxu0 0.0
    %169 = vmatprep.subr.mxu0 0.0
    %170 = vmatpush1.msra.mxu0 0.0
    %171 = vmatprep.subr.mxu0 0.0
    %172 = vmatpush1.msra.mxu0 0.0
    %173 = vmatprep.subr.mxu0 0.0
    %174 = vmatpush1.msra.mxu0 0.0
    %175 = vmatprep.subr.mxu0 0.0
    %176 = vmatpush1.msra.mxu0 0.0
    %177 = vmatprep.subr.mxu0 0.0
    %178 = vmatpush1.msra.mxu0 0.0
    %179 = vmatprep.subr.mxu0 0.0
    %180 = vmatpush1.msra.mxu0 0.0
    %181 = vmatprep.subr.mxu0 0.0
    %182 = vmatpush1.msra.mxu0 0.0
    %183 = vmatprep.subr.mxu0 0.0
    %184 = vmatpush1.msra.mxu0 0.0
    %185 = vmatprep.subr.mxu0 0.0
    %186 = vmatpush1.msra.mxu0 0.0
    %187 = vmatprep.mubr.f32.mxu0 0.0
    %188 = vmatmul.mubr.f32.gmra.mrb[0].mxu0 %v100
    %v189 = vpop.f32.mrb[0].mxu0
    %v190 = vadd.f32 %v61, %v189
    %v191 = vpop.f32.mrb[0].mxu0
    %v192 = vadd.f32 %v61, %v191
    %193 = vmatprep.mubr.f32.mxu0 0.0
    %194 = vmatmul.mubr.f32.gmra.mrb[0].mxu0 %v103
    %v195 = vpop.f32.mrb[0].mxu0
    %v196 = vadd.f32 %v66, %v195
    %v197 = vpop.f32.mrb[0].mxu0
    %v198 = vadd.f32 %v66, %v197
    %199 = vmatprep.mubr.f32.mxu0 0.0
    %200 = vmatmul.mubr.f32.gmra.mrb[0].mxu0 %v106
    %v201 = vpop.f32.mrb[0].mxu0
    %v202 = vadd.f32 %v71, %v201
    %v203 = vpop.f32.mrb[0].mxu0
    %v204 = vadd.f32 %v71, %v203
    %205 = vmatprep.mubr.f32.mxu0 0.0
    %206 = vmatmul.mubr.f32.gmra.mrb[0].mxu0 %v109
    %v207 = vpop.f32.mrb[0].mxu0
    %v208 = vadd.f32 %v76, %v207
    %v209 = vpop.f32.mrb[0].mxu0
    %v210 = vadd.f32 %v76, %v209
    %211 = vmatprep.mubr.f32.mxu0 0.0
    %212 = vmatmul.mubr.f32.gmra.mrb[0].mxu0 %v112
    %v213 = vpop.f32.mrb[0].mxu0
    %v214 = vadd.f32 %v81, %v213
    %v215 = vpop.f32.mrb[0].mxu0
    %v216 = vadd.f32 %v81, %v215
    %217 = vmatprep.mubr.f32.mxu0 0.0
    %218 = vmatmul.mubr.f32.gmra.mrb[0].mxu0 %v115
    %v219 = vpop.f32.mrb[0].mxu0
    %v220 = vadd.f32 %v86, %v219
    %v221 = vpop.f32.mrb[0].mxu0
    %v222 = vadd.f32 %v86, %v221
    %223 = vmatprep.mubr.f32.mxu0 0.0
    %224 = vmatmul.mubr.f32.gmra.mrb[0].mxu0 %v118
    %v225 = vpop.f32.mrb[0].mxu0
    %v226 = vadd.f32 %v91, %v225
    %v227 = vpop.f32.mrb[0].mxu0
    %v228 = vadd.f32 %v91, %v227
    %229 = vmatprep.mubr.f32.mxu0 0.0
    %230 = vmatmul.mubr.f32.gmra.mrb[0].mxu0 %v121
    %v231 = vpop.f32.mrb[0].mxu0
    %v232 = vadd.f32 %v96, %v231
    %v233 = vpop.f32.mrb[0].mxu0
    %v234 = vadd.f32 %v96, %v233
    %235 = vdwg.mxu0
    %v236 = vmax.f32 %v190, 0.0
    %v237 = vmax.f32 %v192, 0.0
    %v238 = vmax.f32 %v196, 0.0
    %v239 = vmax.f32 %v198, 0.0
    %v240 = vmax.f32 %v202, 0.0
    %v241 = vmax.f32 %v204, 0.0
    %v242 = vmax.f32 %v208, 0.0
    %v243 = vmax.f32 %v210, 0.0
    %v244 = vmax.f32 %v214, 0.0
    %v245 = vmax.f32 %v216, 0.0
    %v246 = vmax.f32 %v220, 0.0
    %v247 = vmax.f32 %v222, 0.0
    %v248 = vmax.f32 %v226, 0.0
    %v249 = vmax.f32 %v228, 0.0
    %v250 = vmax.f32 %v232, 0.0
    %v251 = vmax.f32 %v234, 0.0
    %v252 = vld [vmem:[%s3] sm:$0xff]
    %v253 = vld [vmem:[%s3 + $0x8] sm:$0xff]
    %v254 = vld [vmem:[%s3 + $0x10] sm:$0xff]
    %v255 = vld [vmem:[%s3 + $0x18] sm:$0xff]
    %v256 = vld [vmem:[%s4] sm:$0xff]
    %v257 = vld [vmem:[%s4 + $0x8] sm:$0xff]
    %v258 = vld [vmem:[%s4 + $0x10] sm:$0xff]
    %v259 = vld [vmem:[%s4 + $0x18] sm:$0xff]
    %v261 = vsel %vm98, %v256, 0
    %v264 = vsel %vm98, %v257, 0
    %v267 = vsel %vm98, %v258, 0
    %v270 = vsel %vm98, %v259, 0
    %272 = vmatprep.subr.mxu0 %v33
    %273 = vmatpush1.msra.mxu0 %v32
    %274 = vmatprep.subr.mxu0 %v35
    %275 = vmatpush1.msra.mxu0 %v34
    %276 = vmatprep.subr.mxu0 %v37
    %277 = vmatpush1.msra.mxu0 %v36
    %278 = vmatprep.subr.mxu0 %v39
    %279 = vmatpush1.msra.mxu0 %v38
    %280 = vmatprep.subr.mxu0 %v41
    %281 = vmatpush1.msra.mxu0 %v40
    %282 = vmatprep.subr.mxu0 0.0
    %283 = vmatpush1.msra.mxu0 0.0
    %284 = vmatprep.subr.mxu0 0.0
    %285 = vmatpush1.msra.mxu0 0.0
    %286 = vmatprep.subr.mxu0 0.0
    %287 = vmatpush1.msra.mxu0 0.0
    %288 = vmatprep.subr.mxu0 0.0
    %289 = vmatpush1.msra.mxu0 0.0
    %290 = vmatprep.subr.mxu0 0.0
    %291 = vmatpush1.msra.mxu0 0.0
    %292 = vmatprep.subr.mxu0 0.0
    %293 = vmatpush1.msra.mxu0 0.0
    %294 = vmatprep.subr.mxu0 0.0
    %295 = vmatpush1.msra.mxu0 0.0
    %296 = vmatprep.subr.mxu0 0.0
    %297 = vmatpush1.msra.mxu0 0.0
    %298 = vmatprep.subr.mxu0 0.0
    %299 = vmatpush1.msra.mxu0 0.0
    %300 = vmatprep.subr.mxu0 0.0
    %301 = vmatpush1.msra.mxu0 0.0
    %302 = vmatprep.subr.mxu0 0.0
    %303 = vmatpush1.msra.mxu0 0.0
    %304 = vmatprep.subr.mxu0 0.0
    %305 = vmatpush1.msra.mxu0 0.0
    %306 = vmatprep.subr.mxu0 0.0
    %307 = vmatpush1.msra.mxu0 0.0
    %308 = vmatprep.subr.mxu0 0.0
    %309 = vmatpush1.msra.mxu0 0.0
    %310 = vmatprep.subr.mxu0 0.0
    %311 = vmatpush1.msra.mxu0 0.0
    %312 = vmatprep.subr.mxu0 0.0
    %313 = vmatpush1.msra.mxu0 0.0
    %314 = vmatprep.subr.mxu0 0.0
    %315 = vmatpush1.msra.mxu0 0.0
    %316 = vmatprep.subr.mxu0 0.0
    %317 = vmatpush1.msra.mxu0 0.0
    %318 = vmatprep.subr.mxu0 0.0
    %319 = vmatpush1.msra.mxu0 0.0
    %320 = vmatprep.subr.mxu0 0.0
    %321 = vmatpush1.msra.mxu0 0.0
    %322 = vmatprep.subr.mxu0 0.0
    %323 = vmatpush1.msra.mxu0 0.0
    %324 = vmatprep.subr.mxu0 0.0
    %325 = vmatpush1.msra.mxu0 0.0
    %326 = vmatprep.subr.mxu0 0.0
    %327 = vmatpush1.msra.mxu0 0.0
    %328 = vmatprep.subr.mxu0 0.0
    %329 = vmatpush1.msra.mxu0 0.0
    %330 = vmatprep.subr.mxu0 0.0
    %331 = vmatpush1.msra.mxu0 0.0
    %332 = vmatprep.subr.mxu0 0.0
    %333 = vmatpush1.msra.mxu0 0.0
    %334 = vmatprep.subr.mxu0 0.0
    %335 = vmatpush1.msra.mxu0 0.0
    %336 = vmatprep.mubr.f32.mxu0 0.0
    %337 = vmatmul.mubr.f32.gmra.mrb[0].mxu0 %v261
    %v338 = vpop.f32.mrb[0].mxu0
    %v339 = vadd.f32 0.0, %v338
    %v340 = vpop.f32.mrb[0].mxu0
    %v341 = vadd.f32 0.0, %v340
    %342 = vmatprep.mubr.f32.mxu0 0.0
    %343 = vmatmul.mubr.f32.gmra.mrb[0].mxu0 %v264
    %v344 = vpop.f32.mrb[0].mxu0
    %v345 = vadd.f32 0.0, %v344
    %v346 = vpop.f32.mrb[0].mxu0
    %v347 = vadd.f32 0.0, %v346
    %348 = vmatprep.mubr.f32.mxu0 0.0
    %349 = vmatmul.mubr.f32.gmra.mrb[0].mxu0 %v267
    %v350 = vpop.f32.mrb[0].mxu0
    %v351 = vadd.f32 0.0, %v350
    %v352 = vpop.f32.mrb[0].mxu0
    %v353 = vadd.f32 0.0, %v352
    %354 = vmatprep.mubr.f32.mxu0 0.0
    %355 = vmatmul.mubr.f32.gmra.mrb[0].mxu0 %v270
    %v356 = vpop.f32.mrb[0].mxu0
    %v357 = vadd.f32 0.0, %v356
    %v358 = vpop.f32.mrb[0].mxu0
    %v359 = vadd.f32 0.0, %v358
    %360 = vdwg.mxu0
    %vm361 = vcmask 523264
    %v363 = vsel %vm361, %v252, 0
    %v366 = vsel %vm361, %v253, 0
    %v369 = vsel %vm361, %v254, 0
    %v372 = vsel %vm361, %v255, 0
    %374 = vmatprep.subr.mxu0 %v237
    %375 = vmatpush1.msra.mxu0 %v236
    %376 = vmatprep.subr.mxu0 %v239
    %377 = vmatpush1.msra.mxu0 %v238
    %378 = vmatprep.subr.mxu0 %v241
    %379 = vmatpush1.msra.mxu0 %v240
    %380 = vmatprep.subr.mxu0 %v243
    %381 = vmatpush1.msra.mxu0 %v242
    %382 = vmatprep.subr.mxu0 %v245
    %383 = vmatpush1.msra.mxu0 %v244
    %384 = vmatprep.subr.mxu0 %v247
    %385 = vmatpush1.msra.mxu0 %v246
    %386 = vmatprep.subr.mxu0 %v249
    %387 = vmatpush1.msra.mxu0 %v248
    %388 = vmatprep.subr.mxu0 %v251
    %389 = vmatpush1.msra.mxu0 %v250
    %390 = vmatprep.subr.mxu0 0.0
    %391 = vmatpush1.msra.mxu0 0.0
    %392 = vmatprep.subr.mxu0 0.0
    %393 = vmatpush1.msra.mxu0 0.0
    %394 = vmatprep.subr.mxu0 0.0
    %395 = vmatpush1.msra.mxu0 0.0
    %396 = vmatprep.subr.mxu0 0.0
    %397 = vmatpush1.msra.mxu0 0.0
    %398 = vmatprep.subr.mxu0 0.0
    %399 = vmatpush1.msra.mxu0 0.0
    %400 = vmatprep.subr.mxu0 0.0
    %401 = vmatpush1.msra.mxu0 0.0
    %402 = vmatprep.subr.mxu0 0.0
    %403 = vmatpush1.msra.mxu0 0.0
    %404 = vmatprep.subr.mxu0 0.0
    %405 = vmatpush1.msra.mxu0 0.0
    %406 = vmatprep.subr.mxu0 0.0
    %407 = vmatpush1.msra.mxu0 0.0
    %408 = vmatprep.subr.mxu0 0.0
    %409 = vmatpush1.msra.mxu0 0.0
    %410 = vmatprep.subr.mxu0 0.0
    %411 = vmatpush1.msra.mxu0 0.0
    %412 = vmatprep.subr.mxu0 0.0
    %413 = vmatpush1.msra.mxu0 0.0
    %414 = vmatprep.subr.mxu0 0.0
    %415 = vmatpush1.msra.mxu0 0.0
    %416 = vmatprep.subr.mxu0 0.0
    %417 = vmatpush1.msra.mxu0 0.0
    %418 = vmatprep.subr.mxu0 0.0
    %419 = vmatpush1.msra.mxu0 0.0
    %420 = vmatprep.subr.mxu0 0.0
    %421 = vmatpush1.msra.mxu0 0.0
    %422 = vmatprep.subr.mxu0 0.0
    %423 = vmatpush1.msra.mxu0 0.0
    %424 = vmatprep.subr.mxu0 0.0
    %425 = vmatpush1.msra.mxu0 0.0
    %426 = vmatprep.subr.mxu0 0.0
    %427 = vmatpush1.msra.mxu0 0.0
    %428 = vmatprep.subr.mxu0 0.0
    %429 = vmatpush1.msra.mxu0 0.0
    %430 = vmatprep.subr.mxu0 0.0
    %431 = vmatpush1.msra.mxu0 0.0
    %432 = vmatprep.subr.mxu0 0.0
    %433 = vmatpush1.msra.mxu0 0.0
    %434 = vmatprep.subr.mxu0 0.0
    %435 = vmatpush1.msra.mxu0 0.0
    %436 = vmatprep.subr.mxu0 0.0
    %437 = vmatpush1.msra.mxu0 0.0
    %438 = vmatprep.mubr.f32.mxu0 0.0
    %439 = vmatmul.mubr.f32.gmra.mrb[0].mxu0 %v363
    %v440 = vpop.f32.mrb[0].mxu0
    %v441 = vadd.f32 %v339, %v440
    %v442 = vpop.f32.mrb[0].mxu0
    %v443 = vadd.f32 %v341, %v442
    %444 = vmatprep.mubr.f32.mxu0 0.0
    %445 = vmatmul.mubr.f32.gmra.mrb[0].mxu0 %v366
    %v446 = vpop.f32.mrb[0].mxu0
    %v447 = vadd.f32 %v345, %v446
    %v448 = vpop.f32.mrb[0].mxu0
    %v449 = vadd.f32 %v347, %v448
    %450 = vmatprep.mubr.f32.mxu0 0.0
    %451 = vmatmul.mubr.f32.gmra.mrb[0].mxu0 %v369
    %v452 = vpop.f32.mrb[0].mxu0
    %v453 = vadd.f32 %v351, %v452
    %v454 = vpop.f32.mrb[0].mxu0
    %v455 = vadd.f32 %v353, %v454
    %456 = vmatprep.mubr.f32.mxu0 0.0
    %457 = vmatmul.mubr.f32.gmra.mrb[0].mxu0 %v372
    %v458 = vpop.f32.mrb[0].mxu0
    %v459 = vadd.f32 %v357, %v458
    %v460 = vpop.f32.mrb[0].mxu0
    %v461 = vadd.f32 %v359, %v460
    %462 = vdwg.mxu0
    %v463 = vld [vmem:[%s5] sm:$0xff]
    %v464 = vld [vmem:[%s5 + $0x8] sm:$0xff]
    %v465 = vld [vmem:[%s5 + $0x10] sm:$0xff]
    %v466 = vld [vmem:[%s5 + $0x18] sm:$0xff]
    %468 = vset.pattern.permute.xlu0 0
    %469 = vperm.xlu0 %468, %v463
    %v470 = vpop.permute.xlu0 %469
    %473 = vset.pattern.permute.xlu0 0
    %474 = vperm.xlu0 %473, %v464
    %v475 = vpop.permute.xlu0 %474
    %478 = vset.pattern.permute.xlu0 0
    %479 = vperm.xlu0 %478, %v465
    %v480 = vpop.permute.xlu0 %479
    %483 = vset.pattern.permute.xlu0 0
    %484 = vperm.xlu0 %483, %v466
    %v485 = vpop.permute.xlu0 %484
    %v487 = vadd.f32 %v441, %v470
    %v488 = vadd.f32 %v443, %v470
    %v489 = vadd.f32 %v447, %v475
    %v490 = vadd.f32 %v449, %v475
    %v491 = vadd.f32 %v453, %v480
    %v492 = vadd.f32 %v455, %v480
    %v493 = vadd.f32 %v459, %v485
    %v494 = vadd.f32 %v461, %v485
    %v495 = vmax.f32 %v487, 0.0
    %v496 = vmax.f32 %v488, 0.0
    %v497 = vmax.f32 %v489, 0.0
    %v498 = vmax.f32 %v490, 0.0
    %v499 = vmax.f32 %v491, 0.0
    %v500 = vmax.f32 %v492, 0.0
    %v501 = vmax.f32 %v493, 0.0
    %v502 = vmax.f32 %v494, 0.0
    %v503 = vld [vmem:[%s6] sm:$0x1]
    %v504 = vld [vmem:[#allocation2] sm:$0x1]
    %506 = vset.pattern.permute.xlu0 0
    %507 = vperm.xlu0 %506, %v504
    %v508 = vpop.permute.xlu0 %507
    %v510 = vlaneseq
    %v511 = vshrl.u32 %v510, 7
    %v512 = vsub.s32 0, %v511
    %v513 = vrot.slane %v508, %v512
    %vm514 = vcmask 261120
    %v516 = vsel %vm514, %v503, 0
    %518 = vmatprep.subr.mxu0 %v496
    %519 = vmatpush1.msra.mxu0 %v495
    %520 = vmatprep.subr.mxu0 %v498
    %521 = vmatpush1.msra.mxu0 %v497
    %522 = vmatprep.subr.mxu0 %v500
    %523 = vmatpush1.msra.mxu0 %v499
    %524 = vmatprep.subr.mxu0 %v502
    %525 = vmatpush1.msra.mxu0 %v501
    %526 = vmatprep.subr.mxu0 0.0
    %527 = vmatpush1.msra.mxu0 0.0
    %528 = vmatprep.subr.mxu0 0.0
    %529 = vmatpush1.msra.mxu0 0.0
    %530 = vmatprep.subr.mxu0 0.0
    %531 = vmatpush1.msra.mxu0 0.0
    %532 = vmatprep.subr.mxu0 0.0
    %533 = vmatpush1.msra.mxu0 0.0
    %534 = vmatprep.subr.mxu0 0.0
    %535 = vmatpush1.msra.mxu0 0.0
    %536 = vmatprep.subr.mxu0 0.0
    %537 = vmatpush1.msra.mxu0 0.0
    %538 = vmatprep.subr.mxu0 0.0
    %539 = vmatpush1.msra.mxu0 0.0
    %540 = vmatprep.subr.mxu0 0.0
    %541 = vmatpush1.msra.mxu0 0.0
    %542 = vmatprep.subr.mxu0 0.0
    %543 = vmatpush1.msra.mxu0 0.0
    %544 = vmatprep.subr.mxu0 0.0
    %545 = vmatpush1.msra.mxu0 0.0
    %546 = vmatprep.subr.mxu0 0.0
    %547 = vmatpush1.msra.mxu0 0.0
    %548 = vmatprep.subr.mxu0 0.0
    %549 = vmatpush1.msra.mxu0 0.0
    %550 = vmatprep.subr.mxu0 0.0
    %551 = vmatpush1.msra.mxu0 0.0
    %552 = vmatprep.subr.mxu0 0.0
    %553 = vmatpush1.msra.mxu0 0.0
    %554 = vmatprep.subr.mxu0 0.0
    %555 = vmatpush1.msra.mxu0 0.0
    %556 = vmatprep.subr.mxu0 0.0
    %557 = vmatpush1.msra.mxu0 0.0
    %558 = vmatprep.subr.mxu0 0.0
    %559 = vmatpush1.msra.mxu0 0.0
    %560 = vmatprep.subr.mxu0 0.0
    %561 = vmatpush1.msra.mxu0 0.0
    %562 = vmatprep.subr.mxu0 0.0
    %563 = vmatpush1.msra.mxu0 0.0
    %564 = vmatprep.subr.mxu0 0.0
    %565 = vmatpush1.msra.mxu0 0.0
    %566 = vmatprep.subr.mxu0 0.0
    %567 = vmatpush1.msra.mxu0 0.0
    %568 = vmatprep.subr.mxu0 0.0
    %569 = vmatpush1.msra.mxu0 0.0
    %570 = vmatprep.subr.mxu0 0.0
    %571 = vmatpush1.msra.mxu0 0.0
    %572 = vmatprep.subr.mxu0 0.0
    %573 = vmatpush1.msra.mxu0 0.0
    %574 = vmatprep.subr.mxu0 0.0
    %575 = vmatpush1.msra.mxu0 0.0
    %576 = vmatprep.subr.mxu0 0.0
    %577 = vmatpush1.msra.mxu0 0.0
    %578 = vmatprep.subr.mxu0 0.0
    %579 = vmatpush1.msra.mxu0 0.0
    %580 = vmatprep.subr.mxu0 0.0
    %581 = vmatpush1.msra.mxu0 0.0
    %582 = vmatprep.mubr.f32.mxu0 0.0
    %583 = vmatmul.mubr.f32.gmra.mrb[0].mxu0 %v516
    %v584 = vpop.f32.mrb[0].mxu0
    %v585 = vadd.f32 %v513, %v584
    %v586 = vpop.f32.mrb[0].mxu0
    %v587 = vadd.f32 %v513, %v586
    %588 = vdwg.mxu0
    %v591 = vcombine.low %v585, %v587
    %v593 = vunpack.c.l.s4 1966171168
    %v594 = vunpack.c.0.s8 %v593
    %v595 = vlaneseq
    %v596 = vshrl.u32 %v595, 7
    %v597 = vsub.s32 %v594, %v596
    %v598 = vrot.slane %v591, %v597
    %v600 = vunpack.c.l.s4 1966171168
    %v601 = vunpack.c.0.s8 %v600
    %v602 = vlaneseq
    %v603 = vshrl.u32 %v602, 7
    %v604 = vsub.s32 %v601, %v603
    %v605 = vrot.slane %v598, %v604
    %v607 = vlaneseq
    %vm608 = vcmp.ge.s32.totalorder %v607, 0
    %vm609 = vcmp.lt.s32.totalorder %v607, 256
    %vm610 = vmand %vm608, %vm609
    %611 = vst.msk [vmem:[#allocation3] sm:$0x3] %vm610, %v605
    // Predicated region
    $region34: #{tpu_custom_call.1} parent=1 // pred_check
      _
    $region35: #{tpu_custom_call.1} parent=1 // pred_check_branch
      %613 = sbr.rel (0) target = $region37
    $region36: #{tpu_custom_call.1} parent=1 // pred_region
      %s615 = ssub.s32 32, 32
      %616 = vsyncadd [#allocation4], %s615
      %s618 = sshll.u32 [#allocation3], 4
      %s619 = int_to_ptr.vmem [resolvable:$true] %s618
      %621 = dma.vmem_to_hbm [thread:$0]  %s619, 32, %s8, [#allocation4]
    $region37: #{tpu_custom_call.1} parent=1 // pred_fallthru
      _
    // Predicated region
    $region38: #{tpu_custom_call.1} parent=1 // pred_check
      _
    $region39: #{tpu_custom_call.1} parent=1 // pred_check_branch
      %623 = sbr.rel (0) target = $region41
    $region40: #{tpu_custom_call.1} parent=1 // pred_region
      %624 = dma.done [#allocation4], 32
    $region41: #{tpu_custom_call.1} parent=1 // pred_fallthru
      _
    %625 = vsyncpa [#allocation4], 1

</llo_original>
